<compile_context>
chip_gen: v7x
topology: tpu7x:2x2x1
jax: 0.10.0
libtpu: 0.0.40
codegen_flags: <defaults>
</compile_context>

<pallas_src>
import functools
import math

import jax
import jax.numpy as jnp
from jax import lax
from jax.experimental import pallas as pl
from jax.experimental.pallas import tpu as pltpu


# ---------------------------------------------------------------------------
# VMEM budget helper
# ---------------------------------------------------------------------------

def _vmem_limit_bytes():
    try:
        cap = int(pltpu.get_tpu_info().vmem_capacity_bytes)
    except Exception:
        cap = 64 * 1024 * 1024                       # conservative (v7x-sized) fallback
    return max(32 * 1024 * 1024, min((cap * 3) // 4, 100 * 1024 * 1024))


# ---------------------------------------------------------------------------
# Stage 1: tiled linear  y = x @ W + b   (compute_dtype inputs, f32 accumulate)
# ---------------------------------------------------------------------------

def _linear_kernel(x_ref, w_ref, b_ref, o_ref):
    acc = jnp.dot(x_ref[...], w_ref[...], preferred_element_type=jnp.float32)
    o_ref[...] = (acc + b_ref[...]).astype(o_ref.dtype)


def _pick_linear_tiles(R, Ein, Eout, itemsize, budget):
    tr_cands = [t for t in (1024, 512, 256, 128, 64, 32, 16, 8)
                if t <= R and R % t == 0] or [R]
    tn_cands = [t for t in (1024, 512, 256, 128)
                if t <= Eout and Eout % t == 0] or [Eout]
    for tr in tr_cands:
        for tn in tn_cands:
            per = (2 * (tr * Ein * itemsize + Ein * tn * itemsize
                        + tn * 4 + tr * tn * itemsize)
                   + tr * tn * 4)                    # f32 accumulator live values
            if per <= budget:
                return tr, tn
    return tr_cands[-1], tn_cands[-1]


def _linear(x2d, w_t, b, *, out_dtype, vmem_limit):
    # TODO(synk): add a K-tiled contraction axis + f32 scratch accumulator for
    # very large input embed dims; here the full contraction fits per step.
    R, Ein = x2d.shape
    Eout = w_t.shape[1]
    itemsize = jnp.dtype(x2d.dtype).itemsize
    TR, TN = _pick_linear_tiles(R, Ein, Eout, itemsize, (vmem_limit * 3) // 4)
    b2d = jnp.asarray(b).reshape(1, Eout).astype(jnp.float32)

    cost = pl.CostEstimate(
        flops=2 * R * Ein * Eout,
        transcendentals=0,
        bytes_accessed=(R * Ein + Ein * Eout + R * Eout) * itemsize + Eout * 4)

    return pl.pallas_call(
        _linear_kernel,
        out_shape=jax.ShapeDtypeStruct((R, Eout), out_dtype),
        grid_spec=pltpu.PrefetchScalarGridSpec(
            num_scalar_prefetch=0,
            grid=(R // TR, Eout // TN),
            in_specs=[
                pl.BlockSpec((TR, Ein), lambda r, n: (r, 0)),   # x row tile
                pl.BlockSpec((Ein, TN), lambda r, n: (0, n)),   # weight column tile
                pl.BlockSpec((1, TN), lambda r, n: (0, n)),     # bias
            ],
            out_specs=pl.BlockSpec((TR, TN), lambda r, n: (r, n)),
            scratch_shapes=[]),
        compiler_params=pltpu.CompilerParams(
            dimension_semantics=("parallel", "parallel"),
            vmem_limit_bytes=vmem_limit),
        cost_estimate=cost,
    )(x2d, w_t, b2d)


# ---------------------------------------------------------------------------
# Stage 2: per-head attention + folded output projection
# ---------------------------------------------------------------------------

def _attn_kernel(q_ref, k_ref, v_ref, wo_ref, bo_ref, out_ref, *rest,
                 scale, return_attn, single_kv, acc_in_out):
    i = 0
    attn_ref = None
    if return_attn:
        attn_ref = rest[i]
        i += 1
    if not single_kv:
        m_scr, l_scr, ctx_scr = rest[i], rest[i + 1], rest[i + 2]
        i += 3
    acc_scr = None if acc_in_out else rest[i]

    h, kv = pl.program_id(2), pl.program_id(3)
    nh, nkv = pl.num_programs(2), pl.num_programs(3)
    f32 = jnp.float32

    q = q_ref[0, 0]                    # (TQ, D)  compute dtype
    k = k_ref[0, 0]                    # (TK, D)
    v = v_ref[0, 0]                    # (TK, D)

    # Scores: contract the head dims directly (no .T / XLU transpose).
    s = lax.dot_general(q, k, (((1,), (1,)), ((), ())),
                        preferred_element_type=f32) * scale      # (TQ, TK) f32

    def accumulate_heads(ctx_f32):
        # out = sum_h ctx_h @ Wo[h]  ==  concat_h(ctx_h) @ Wo   (merge+linear fold)
        contrib = jnp.dot(ctx_f32.astype(wo_ref.dtype), wo_ref[0],
                          preferred_element_type=f32)            # (TQ, E)
        if acc_in_out:      # f32 output: accumulate straight into the resident block
            @pl.when(h == 0)
            def _():
                out_ref[0] = contrib + bo_ref[...]

            @pl.when(h > 0)
            def _():
                out_ref[0] = out_ref[0] + contrib
        else:
            @pl.when(h == 0)
            def _():
                acc_scr[...] = contrib + bo_ref[...]

            @pl.when(h > 0)
            def _():
                acc_scr[...] += contrib

            @pl.when(h == nh - 1)
            def _():
                out_ref[0] = acc_scr[...].astype(out_ref.dtype)

    if single_kv:
        # Exact softmax over the full key row (required to return the weights).
        m = jnp.max(s, axis=-1, keepdims=True)
        p = jnp.exp(s - m)
        l = jnp.sum(p, axis=-1, keepdims=True)
        if return_attn:
            w = p / l                                # exact divide: rows sum to 1
            attn_ref[0, 0] = w.astype(attn_ref.dtype)
            ctx = jnp.dot(w.astype(v.dtype), v, preferred_element_type=f32)
        else:
            ctx = jnp.dot(p.astype(v.dtype), v, preferred_element_type=f32)
            ctx = ctx * pl.reciprocal(l, approx=True)      # EUP slot, not VALU
        accumulate_heads(ctx)
    else:
        # Flash-style online softmax over the kv grid axis (weights not returned).
        @pl.when(kv == 0)
        def _():
            m_scr[...] = jnp.full_like(m_scr, -jnp.inf)
            l_scr[...] = jnp.zeros_like(l_scr)
            ctx_scr[...] = jnp.zeros_like(ctx_scr)

        m_prev = m_scr[...]
        m_new = jnp.maximum(m_prev, jnp.max(s, axis=-1, keepdims=True))
        alpha = jnp.exp(m_prev - m_new)
        p = jnp.exp(s - m_new)
        l_scr[...] = alpha * l_scr[...] + jnp.sum(p, axis=-1, keepdims=True)
        ctx_scr[...] = alpha * ctx_scr[...] + jnp.dot(
            p.astype(v.dtype), v, preferred_element_type=f32)
        m_scr[...] = m_new

        @pl.when(kv == nkv - 1)
        def _():
            ctx = ctx_scr[...] * pl.reciprocal(l_scr[...], approx=True)
            accumulate_heads(ctx)


def _pick_attn_tiles(B, Lq, Lk, D, E, *, cdt_isz, out_isz, attn_isz,
                     return_attn, budget):
    """Largest (TQ, TK) whose per-step footprint (double-buffered blocks +
    scratch + f32 score/exp intermediates) fits the budget."""

    def per_step(tq, tk):
        dbl = 2 * (tq * D * cdt_isz                    # q block
                   + 2 * tk * D * cdt_isz              # k + v blocks
                   + D * E * cdt_isz                   # Wo[h]
                   + E * 4                             # bo
                   + tq * E * out_isz                  # out block
                   + (tq * tk * attn_isz if return_attn else 0))
        scr = 2 * tq * 128 * 4 + tq * max(D, 128) * 4 + tq * E * 4
        live = 3 * tq * tk * 4                         # scores / exp / weights
        return dbl + scr + live

    tq_cands = [t for t in (512, 256, 128, 64, 32, 16, 8)
                if t <= Lq and Lq % t == 0] or [Lq]
    if B == 1:   # keep >= 2 parallel query tiles so both v7x TensorCores get work
        multi = [t for t in tq_cands if Lq // t >= 2]
        tq_cands = multi or tq_cands

    if return_attn:
        tk_cands = [Lk]
    else:
        tk_cands = sorted({Lk} | {t for t in (2048, 1024, 512, 256, 128)
                                  if t <= Lk and Lk % t == 0}, reverse=True)

    for tq in tq_cands:
        for tk in tk_cands:
            if per_step(tq, tk) <= budget:
                return tq, tk
    return tq_cands[-1], tk_cands[-1]


def multi_head_attention(queries, keys, values, params, num_heads, *,
                         compute_dtype=jnp.bfloat16,
                         attn_dtype=jnp.bfloat16,
                         return_attention_weights=True,
                         q_tile=None, kv_tile=None):
    """params: dict of PyTorch-shaped weights (out,in) and biases (out,)."""
    B, Lq, Eq = queries.shape
    Bk, Lk, Ek = keys.shape
    assert Bk == B and values.shape == keys.shape
    # The PyTorch module's split_heads/merge only makes sense when the two embed
    # dims match (it splits k/v with head_dim_queries and merges to embed_dim_queries).
    assert Eq == Ek, "embed_dim_queries must equal embed_dim_keys for this module"
    assert Eq % num_heads == 0 and Ek % num_heads == 0
    H = num_heads
    D = Eq // H                                  # head_dim_queries (all splits)
    Dk = Ek // H                                 # head_dim_keys (scale only)
    scale = 1.0 / math.sqrt(float(Dk))
    cdt = jnp.dtype(compute_dtype)
    out_dtype = queries.dtype
    vmem_limit = _vmem_limit_bytes()

    # ---- Stage 1: Q/K/V projections, computed once (bf16 cast in the wrapper) ----
    wq_t = jnp.asarray(params["wq"]).T.astype(cdt)        # (Eq, Eq)
    wk_t = jnp.asarray(params["wk"]).T.astype(cdt)        # (Ek, Ek)
    wv_t = jnp.asarray(params["wv"]).T.astype(cdt)        # (Ek, Ek)

    q_p = _linear(queries.reshape(B * Lq, Eq).astype(cdt), wq_t, params["bq"],
                  out_dtype=cdt, vmem_limit=vmem_limit)
    k_p = _linear(keys.reshape(B * Lk, Ek).astype(cdt), wk_t, params["bk"],
                  out_dtype=cdt, vmem_limit=vmem_limit)
    v_p = _linear(values.reshape(B * Lk, Ek).astype(cdt), wv_t, params["bv"],
                  out_dtype=cdt, vmem_limit=vmem_limit)

    # Head-major layout (wrapper-side layout plumbing; lane dim = D, full extent).
    q_h = q_p.reshape(B, Lq, H, D).transpose(0, 2, 1, 3)   # (B, H, Lq, D)
    k_h = k_p.reshape(B, Lk, H, D).transpose(0, 2, 1, 3)   # (B, H, Lk, D)
    v_h = v_p.reshape(B, Lk, H, D).transpose(0, 2, 1, 3)   # (B, H, Lk, D)

    wo_h = jnp.asarray(params["wo"]).T.reshape(H, D, Eq).astype(cdt)    # (H, D, Eq)
    bo = jnp.asarray(params["bo"]).reshape(1, Eq).astype(jnp.float32)   # (1, Eq)

    # ---- Stage 2: attention + folded output projection ----
    attn_isz = jnp.dtype(attn_dtype).itemsize if return_attention_weights else 0
    TQ, TK = _pick_attn_tiles(
        B, Lq, Lk, D, Eq, cdt_isz=cdt.itemsize,
        out_isz=jnp.dtype(out_dtype).itemsize, attn_isz=attn_isz,
        return_attn=return_attention_weights, budget=(vmem_limit * 3) // 4)
    if q_tile is not None:
        TQ = q_tile
    if kv_tile is not None and not return_attention_weights:
        TK = kv_tile
    if return_attention_weights:
        TK = Lk                         # exact softmax weights need the full key row
    assert Lq % TQ == 0 and Lk % TK == 0
    single_kv = (TK == Lk)
    acc_in_out = (jnp.dtype(out_dtype) == jnp.dtype(jnp.float32))

    grid = (B, Lq // TQ, H, Lk // TK)

    in_specs = [
        pl.BlockSpec((1, 1, TQ, D), lambda b, qt, h, kv: (b, h, qt, 0)),   # q_h
        pl.BlockSpec((1, 1, TK, D), lambda b, qt, h, kv: (b, h, kv, 0)),   # k_h
        pl.BlockSpec((1, 1, TK, D), lambda b, qt, h, kv: (b, h, kv, 0)),   # v_h
        pl.BlockSpec((1, D, Eq), lambda b, qt, h, kv: (h, 0, 0)),          # Wo[h]
        pl.BlockSpec((1, Eq), lambda b, qt, h, kv: (0, 0)),                # bo
    ]
    out_specs = [pl.BlockSpec((1, TQ, Eq), lambda b, qt, h, kv: (b, qt, 0))]
    out_shapes = [jax.ShapeDtypeStruct((B, Lq, Eq), out_dtype)]
    if return_attention_weights:
        out_specs.append(
            pl.BlockSpec((1, 1, TQ, TK), lambda b, qt, h, kv: (b, h, qt, kv)))
        out_shapes.append(jax.ShapeDtypeStruct((B, H, Lq, Lk), attn_dtype))

    scratch_shapes = []
    if not single_kv:
        scratch_shapes += [pltpu.VMEM((TQ, 1), jnp.float32),   # running max
                           pltpu.VMEM((TQ, 1), jnp.float32),   # running sum
                           pltpu.VMEM((TQ, D), jnp.float32)]   # running context
    if not acc_in_out:
        scratch_shapes += [pltpu.VMEM((TQ, Eq), jnp.float32)]  # head-sum accumulator

    kernel = functools.partial(
        _attn_kernel, scale=scale, return_attn=return_attention_weights,
        single_kv=single_kv, acc_in_out=acc_in_out)

    flops = B * H * (4 * Lq * Lk * D + 2 * Lq * D * Eq)
    bytes_acc = (int(q_h.size) + int(k_h.size) + int(v_h.size)
                 + int(wo_h.size)) * cdt.itemsize \
        + B * Lq * Eq * jnp.dtype(out_dtype).itemsize \
        + B * H * Lq * Lk * attn_isz
    cost = pl.CostEstimate(flops=flops, transcendentals=B * H * Lq * Lk,
                           bytes_accessed=bytes_acc)

    result = pl.pallas_call(
        kernel,
        out_shape=tuple(out_shapes) if return_attention_weights else out_shapes[0],
        grid_spec=pltpu.PrefetchScalarGridSpec(
            num_scalar_prefetch=0,
            grid=grid,
            in_specs=in_specs,
            out_specs=tuple(out_specs) if return_attention_weights else out_specs[0],
            scratch_shapes=scratch_shapes),
        compiler_params=pltpu.CompilerParams(
            dimension_semantics=("parallel", "parallel", "arbitrary", "arbitrary"),
            vmem_limit_bytes=vmem_limit),
        cost_estimate=cost,
    )(q_h, k_h, v_h, wo_h, bo)

    if return_attention_weights:
        out, attn = result
        return out, attn
    return result


# ---------------------------------------------------------------------------
# Pure-JAX mirror of the PyTorch forward (for validation)
# ---------------------------------------------------------------------------

def mha_reference(queries, keys, values, params, num_heads):
    B, Lq, Eq = queries.shape
    _, Lk, Ek = keys.shape
    Dq = Eq // num_heads
    Dk = Ek // num_heads

    q = queries @ params["wq"].T + params["bq"]
    k = keys @ params["wk"].T + params["bk"]
    v = values @ params["wv"].T + params["bv"]

    def split(x, L):
        return x.reshape(B, L, num_heads, Dq).transpose(0, 2, 1, 3)

    qh, kh, vh = split(q, Lq), split(k, Lk), split(v, Lk)
    scores = jnp.einsum("bhqd,bhkd->bhqk", qh, kh) / (Dk ** 0.5)
    weights = jax.nn.softmax(scores, axis=-1)
    out = jnp.einsum("bhqk,bhkd->bhqd", weights, vh)
    out = out.transpose(0, 2, 1, 3).reshape(B, Lq, Eq)
    out = out @ params["wo"].T + params["bo"]
    return out, weights


def _make_params(key, e_q, e_k):
    ks = jax.random.split(key, 8)
    return {
        "wq": jax.random.normal(ks[0], (e_q, e_q), jnp.float32) * 0.1,
        "bq": jax.random.normal(ks[1], (e_q,), jnp.float32) * 0.1,
        "wk": jax.random.normal(ks[2], (e_k, e_k), jnp.float32) * 0.1,
        "bk": jax.random.normal(ks[3], (e_k,), jnp.float32) * 0.1,
        "wv": jax.random.normal(ks[4], (e_k, e_k), jnp.float32) * 0.1,
        "bv": jax.random.normal(ks[5], (e_k,), jnp.float32) * 0.1,
        "wo": jax.random.normal(ks[6], (e_q, e_q), jnp.float32) * 0.1,
        "bo": jax.random.normal(ks[7], (e_q,), jnp.float32) * 0.1,
    }


if __name__ == "__main__":
    # --- Small shapes matching the module (batch=2, seq=8, embed=32, heads=4) ---
    B, Lq, Lk = 2, 8, 8
    embed_dim_queries = 32
    embed_dim_keys = 32
    num_heads = 4

    key = jax.random.PRNGKey(0)
    kp, kq, kk, kv = jax.random.split(key, 4)
    params = _make_params(kp, embed_dim_queries, embed_dim_keys)
    queries = jax.random.normal(kq, (B, Lq, embed_dim_queries), jnp.float32)
    keys_in = jax.random.normal(kk, (B, Lk, embed_dim_keys), jnp.float32)
    values_in = jax.random.normal(kv, (B, Lk, embed_dim_keys), jnp.float32)

    ref_out, ref_attn = mha_reference(queries, keys_in, values_in, params, num_heads)

    # Default path: bf16 MXU inputs, f32 accumulation/softmax, bf16 attn writeback.
    out, attn = multi_head_attention(queries, keys_in, values_in, params, num_heads)
    out = jax.block_until_ready(out)
    attn = jax.block_until_ready(attn)
    assert out.shape == (B, Lq, embed_dim_queries)
    assert attn.shape == (B, num_heads, Lq, Lk)
    assert jnp.allclose(out, ref_out, atol=3e-2, rtol=3e-2)
    assert jnp.allclose(attn.astype(jnp.float32), ref_attn, atol=3e-2, rtol=3e-2)

    # Full-f32 compute path (tighter check; exact softmax divide on this path).
    out32, attn32 = multi_head_attention(
        queries, keys_in, values_in, params, num_heads,
        compute_dtype=jnp.float32, attn_dtype=jnp.float32)
    out32 = jax.block_until_ready(out32)
    attn32 = jax.block_until_ready(attn32)
    assert jnp.allclose(out32, ref_out, atol=1e-2, rtol=1e-2)
    assert jnp.allclose(attn32, ref_attn, atol=1e-2, rtol=1e-2)

    # Output-only path (skips the O(B*H*Lq*Lk) attention-weight writeback).
    out_only = multi_head_attention(queries, keys_in, values_in, params, num_heads,
                                    return_attention_weights=False)
    out_only = jax.block_until_ready(out_only)
    assert out_only.shape == (B, Lq, embed_dim_queries)
    assert jnp.allclose(out_only, ref_out, atol=3e-2, rtol=3e-2)

    # Flash path (tiled-Lk online softmax) exercised at a slightly larger shape.
    B2, L2, E2, H2 = 1, 256, 128, 4
    key2 = jax.random.PRNGKey(1)
    kp2, kq2, kk2, kv2 = jax.random.split(key2, 4)
    params2 = _make_params(kp2, E2, E2)
    q2 = jax.random.normal(kq2, (B2, L2, E2), jnp.float32)
    k2 = jax.random.normal(kk2, (B2, L2, E2), jnp.float32)
    v2 = jax.random.normal(kv2, (B2, L2, E2), jnp.float32)
    ref_out2, _ = mha_reference(q2, k2, v2, params2, H2)
    out2 = multi_head_attention(q2, k2, v2, params2, H2,
                                return_attention_weights=False, kv_tile=128)
    out2 = jax.block_until_ready(out2)
    assert out2.shape == (B2, L2, E2)
    assert jnp.allclose(out2, ref_out2, atol=5e-2, rtol=5e-2)

    print("KERNEL_OK")
</pallas_src>

<mosaic_0001>
module attributes {stable_mosaic.version = 11 : i64} {
  func.func @_linear_kernel(%arg0: i32, %arg1: i32, %arg2: memref<16x32xbf16, #tpu.memory_space<vmem>>, %arg3: memref<32x32xbf16, #tpu.memory_space<vmem>>, %arg4: memref<1x32xf32, #tpu.memory_space<vmem>>, %arg5: memref<16x32xbf16, #tpu.memory_space<vmem>>) attributes {dimension_semantics = [#tpu.dimension_semantics<parallel>, #tpu.dimension_semantics<parallel>], iteration_bounds = array<i64: 1, 1>, scalar_prefetch = 0 : i64, scratch_operands = 0 : i64, tpu.core_type = #tpu.core_type<tc>, window_params = [{transform_indices = @transform_0, window_bounds = array<i64: 16, 32>}, {transform_indices = @transform_1, window_bounds = array<i64: 32, 32>}, {transform_indices = @transform_2, window_bounds = array<i64: 1, 32>}, {transform_indices = @transform_3, window_bounds = array<i64: 16, 32>}]} {
    %c0 = arith.constant 0 : index
    %c0_0 = arith.constant 0 : index
    %0 = vector.load %arg2[%c0, %c0_0] : memref<16x32xbf16, #tpu.memory_space<vmem>>, vector<16x32xbf16>
    %c0_1 = arith.constant 0 : index
    %c0_2 = arith.constant 0 : index
    %1 = vector.load %arg3[%c0_1, %c0_2] : memref<32x32xbf16, #tpu.memory_space<vmem>>, vector<32x32xbf16>
    %cst = arith.constant dense<0.000000e+00> : vector<16x32xf32>
    %2 = tpu.matmul %0, %1, %cst {dimension_numbers = #tpu.dot_dimension_numbers<[1], [0], [0], [1], [0, 0, 1, 1], [], []>} : vector<16x32xbf16>, vector<32x32xbf16>, vector<16x32xf32> -> vector<16x32xf32>
    %c0_3 = arith.constant 0 : index
    %c0_4 = arith.constant 0 : index
    %3 = vector.load %arg4[%c0_3, %c0_4] : memref<1x32xf32, #tpu.memory_space<vmem>>, vector<1x32xf32>
    %4 = vector.broadcast %3 : vector<1x32xf32> to vector<16x32xf32>
    %5 = arith.addf %2, %4 : vector<16x32xf32>
    %6 = arith.truncf %5 : vector<16x32xf32> to vector<16x32xbf16>
    %c0_5 = arith.constant 0 : index
    %c0_6 = arith.constant 0 : index
    %7 = vector.load %arg5[%c0_5, %c0_6] : memref<16x32xbf16, #tpu.memory_space<vmem>>, vector<16x32xbf16>
    tpu.vector_store %arg5[%c0_5, %c0_6], %6 {strides = array<i32>} : memref<16x32xbf16, #tpu.memory_space<vmem>>, vector<16x32xbf16>,
    return
  }
  func.func @transform_0(%arg0: i32, %arg1: i32) -> (i32, i32) {
    %c0_i32 = arith.constant 0 : i32
    %c0_i32_0 = arith.constant 0 : i32
    return %arg0, %c0_i32 : i32, i32
  }
  func.func @transform_1(%arg0: i32, %arg1: i32) -> (i32, i32) {
    %c0_i32 = arith.constant 0 : i32
    %c0_i32_0 = arith.constant 0 : i32
    return %c0_i32, %arg1 : i32, i32
  }
  func.func @transform_2(%arg0: i32, %arg1: i32) -> (i32, i32) {
    %c0_i32 = arith.constant 0 : i32
    %c0_i32_0 = arith.constant 0 : i32
    return %c0_i32, %arg1 : i32, i32
  }
  func.func @transform_3(%arg0: i32, %arg1: i32) -> (i32, i32) {
    %c0_i32 = arith.constant 0 : i32
    return %arg0, %arg1 : i32, i32
  }
}

</mosaic_0001>

<llo_original>
// kernel: tpu_custom_call.1
$region0: #{tpu_custom_call.1}
  #allocation0 [shape = 'u32[]', space=smem, size = 0x4, offset = 0x4, fixed_abs, tag = 'smem constant byte address 0x4 - core index']
  #allocation1 [shape = 'u32[144,128]{1,0:T(1,128)}', space=vmem, size = 0x12000, scoped, tag = 'internal scratch']
  %s0 = inlined_call_operand.hbm [shape: bf16[16,32], index: 0, kind: input, shape index: {}]
  %s1 = inlined_call_operand.hbm [shape: bf16[32,32], index: 1, kind: input, shape index: {}]
  %s2 = inlined_call_operand.vmem [shape: f32[1,32], index: 2, kind: input, shape index: {}]
  %s3 = inlined_call_operand.hbm [shape: bf16[16,32], index: 3, kind: output, shape index: {}]
  %s4 = sld [smem:[#allocation0]]
  $region30: #{tpu_custom_call.1} parent=0
    _
  %s6 = ssub.s32 1, %s4
  %s7 = scalar_select 0, %s6, %s4
  $region1: #{tpu_custom_call.1} parent=0
    #allocation2 [shape = 'u8[4096]{0}', space=vmem, size = 0x1000, scoped, tag = 'input window, operand 0, single buffered']
    #allocation3 [shape = 's32[1]{0}', space=sflag, size = 0x4, scoped, tag = 'scoped memory for tpu_custom_call.1']
    #allocation4 [shape = 's32[1]{0}', space=sflag, size = 0x4, scoped, tag = 'scoped memory for tpu_custom_call.1']
    #allocation5 [shape = 'u8[8192]{0}', space=vmem, size = 0x2000, scoped, tag = 'input window, operand 1, single buffered']
    #allocation6 [shape = 's32[1]{0}', space=sflag, size = 0x4, scoped, tag = 'scoped memory for tpu_custom_call.1']
    #allocation7 [shape = 'u8[4096]{0}', space=vmem, size = 0x1000, scoped, tag = 'output window, operand 0, single buffered']
    %8 = vsyncpa [#allocation3], 0
    %9 = vsyncpa [#allocation6], 0
    %10 = vsyncpa [#allocation4], 0
    // Predicated region
    $region2: #{tpu_custom_call.1} parent=1 // pred_check
      _
    $region3: #{tpu_custom_call.1} parent=1 // pred_check_branch
      %12 = sbr.rel (0) target = $region5
    $region4: #{tpu_custom_call.1} parent=1 // pred_region
      %s14 = ssub.s32 128, 128
      %15 = vsyncadd [#allocation3], %s14
      %s16 = sshll.u32 [#allocation2], 4
      %s17 = int_to_ptr.vmem [resolvable:$true] %s16
      %22 = dma.hbm_to_vmem [thread:$0]  %s0, 128, %s17, [#allocation3], 64, 64, 4
    $region5: #{tpu_custom_call.1} parent=1 // pred_fallthru
      _
    // Predicated region
    $region6: #{tpu_custom_call.1} parent=1 // pred_check
      _
    $region7: #{tpu_custom_call.1} parent=1 // pred_check_branch
      %24 = sbr.rel (0) target = $region9
    $region8: #{tpu_custom_call.1} parent=1 // pred_region
      %s26 = ssub.s32 256, 256
      %27 = vsyncadd [#allocation6], %s26
      %s28 = sshll.u32 [#allocation5], 4
      %s29 = int_to_ptr.vmem [resolvable:$true] %s28
      %34 = dma.hbm_to_vmem [thread:$0]  %s1, 256, %s29, [#allocation6], 64, 64, 4
    $region9: #{tpu_custom_call.1} parent=1 // pred_fallthru
      _
    // Predicated region
    $region10: #{tpu_custom_call.1} parent=1 // pred_check
      _
    $region11: #{tpu_custom_call.1} parent=1 // pred_check_branch
      %36 = sbr.rel (0) target = $region13
    $region12: #{tpu_custom_call.1} parent=1 // pred_region
      _
    $region13: #{tpu_custom_call.1} parent=1 // pred_fallthru
      _
    // Predicated region
    $region14: #{tpu_custom_call.1} parent=1 // pred_check
      _
    $region15: #{tpu_custom_call.1} parent=1 // pred_check_branch
      %38 = sbr.rel (0) target = $region17
    $region16: #{tpu_custom_call.1} parent=1 // pred_region
      %39 = dma.done [#allocation3], 128
    $region17: #{tpu_custom_call.1} parent=1 // pred_fallthru
      _
    // Predicated region
    $region18: #{tpu_custom_call.1} parent=1 // pred_check
      _
    $region19: #{tpu_custom_call.1} parent=1 // pred_check_branch
      %41 = sbr.rel (0) target = $region21
    $region20: #{tpu_custom_call.1} parent=1 // pred_region
      %42 = dma.done [#allocation6], 256
    $region21: #{tpu_custom_call.1} parent=1 // pred_fallthru
      _
    %v44 = vld [vmem:[#allocation2] sm:$0xf]
    %v45 = vld [vmem:[#allocation2 + $0x4] sm:$0xf]
    %v46 = vld [vmem:[#allocation5] sm:$0xf]
    %v47 = vld [vmem:[#allocation5 + $0x4] sm:$0xf]
    %v48 = vld [vmem:[#allocation5 + $0x8] sm:$0xf]
    %v49 = vld [vmem:[#allocation5 + $0xc] sm:$0xf]
    %v50 = vld [vmem:[%s2] sm:$0x1]
    %v52 = vlaneseq
    %v53 = vshrl.u32 %v52, 7
    %v54 = vsub.s32 0, %v53
    %v55 = vrot.slane %v50, %v54
    %v59 = vunpack.c.l.b16 %v44
    %v60 = vunpack.c.l.b16 %v45
    %v61 = vpack.c.b16 %v60, %v59
    %v66 = vunpack.c.l.b16 %v46
    %v67 = vunpack.c.l.b16 %v47
    %v68 = vunpack.c.l.b16 %v48
    %v69 = vunpack.c.l.b16 %v49
    %v70 = vpack.c.b16 %v67, %v66
    %v71 = vpack.c.b16 %v69, %v68
    %vm74 = vcmask 261120
    %v76 = vsel %vm74, %v61, 0
    %78 = vmatprep.subr.bf16.mxu0 0
    %79 = vmatpush1.bf16.msra.mxu0 %v70
    %80 = vmatprep.subr.bf16.mxu0 0
    %81 = vmatpush1.bf16.msra.mxu0 %v71
    %82 = vmatprep.subr.bf16.mxu0 0
    %83 = vmatpush1.bf16.msra.mxu0 0
    %84 = vmatprep.subr.bf16.mxu0 0
    %85 = vmatpush1.bf16.msra.mxu0 0
    %86 = vmatprep.subr.bf16.mxu0 0
    %87 = vmatpush1.bf16.msra.mxu0 0
    %88 = vmatprep.subr.bf16.mxu0 0
    %89 = vmatpush1.bf16.msra.mxu0 0
    %90 = vmatprep.subr.bf16.mxu0 0
    %91 = vmatpush1.bf16.msra.mxu0 0
    %92 = vmatprep.subr.bf16.mxu0 0
    %93 = vmatpush1.bf16.msra.mxu0 0
    %94 = vmatprep.subr.bf16.mxu0 0
    %95 = vmatpush1.bf16.msra.mxu0 0
    %96 = vmatprep.subr.bf16.mxu0 0
    %97 = vmatpush1.bf16.msra.mxu0 0
    %98 = vmatprep.subr.bf16.mxu0 0
    %99 = vmatpush1.bf16.msra.mxu0 0
    %100 = vmatprep.subr.bf16.mxu0 0
    %101 = vmatpush1.bf16.msra.mxu0 0
    %102 = vmatprep.subr.bf16.mxu0 0
    %103 = vmatpush1.bf16.msra.mxu0 0
    %104 = vmatprep.subr.bf16.mxu0 0
    %105 = vmatpush1.bf16.msra.mxu0 0
    %106 = vmatprep.subr.bf16.mxu0 0
    %107 = vmatpush1.bf16.msra.mxu0 0
    %108 = vmatprep.subr.bf16.mxu0 0
    %109 = vmatpush1.bf16.msra.mxu0 0
    %110 = vmatprep.mubr.bf16.mxu0 0
    %111 = vmatmul.mubr.bf16.gmra.mrb[0].mxu0 %v76
    %v112 = vpop.f32.mrb[0].mxu0
    %v113 = vadd.f32 %v55, %v112
    %v114 = vpop.f32.mrb[0].mxu0
    %v115 = vpop.f32.mrb[0].mxu0
    %v116 = vadd.f32 %v55, %v115
    %v117 = vpop.f32.mrb[0].mxu0
    %118 = vdwg.mxu0
    %v119 = vpack.c.bf16 %v116, %v113
    %v121 = vunpack.c.l.b16 %v119
    %v122 = vunpack.c.h.b16 %v119
    %v123 = vpack.c.b16 %v121, %v121
    %v124 = vpack.c.b16 %v122, %v122
    %vm127 = vcmask 257024
    %128 = vst.msk [vmem:[#allocation7] sm:$0xf] %vm127, %v123
    %129 = vst.msk [vmem:[#allocation7 + $0x4] sm:$0xf] %vm127, %v124
    // Predicated region
    $region22: #{tpu_custom_call.1} parent=1 // pred_check
      _
    $region23: #{tpu_custom_call.1} parent=1 // pred_check_branch
      %131 = sbr.rel (0) target = $region25
    $region24: #{tpu_custom_call.1} parent=1 // pred_region
      %s133 = ssub.s32 128, 128
      %134 = vsyncadd [#allocation4], %s133
      %s135 = sshll.u32 [#allocation7], 4
      %s136 = int_to_ptr.vmem [resolvable:$true] %s135
      %141 = dma.vmem_to_hbm [thread:$0]  %s136, 128, %s3, [#allocation4], 64, 64, 4
    $region25: #{tpu_custom_call.1} parent=1 // pred_fallthru
      _
    // Predicated region
    $region26: #{tpu_custom_call.1} parent=1 // pred_check
      _
    $region27: #{tpu_custom_call.1} parent=1 // pred_check_branch
      %143 = sbr.rel (0) target = $region29
    $region28: #{tpu_custom_call.1} parent=1 // pred_region
      %144 = dma.done [#allocation4], 128
    $region29: #{tpu_custom_call.1} parent=1 // pred_fallthru
      _
    %145 = vsyncpa [#allocation3], 1
    %146 = vsyncpa [#allocation6], 1
    %147 = vsyncpa [#allocation4], 1

</llo_original>
